<compile_context>
chip_gen: v5e
topology: v5e:2x2
jax: 0.10.0
libtpu: 0.0.40
codegen_flags: <defaults>
</compile_context>

<pallas_src>
import jax
import jax.numpy as jnp
from jax.experimental import pallas as pl
from jax.experimental.pallas import tpu as pltpu


# --------------------------------------------------------------------------- #
# Pallas kernel                                                               #
# --------------------------------------------------------------------------- #

def _norm_kernel(x_ref, off_ref, o_ref):
    # x_ref: (tr, tl) tile of the flattened activation.
    # off_ref: (tr, 1) per-row constant (rows layout) or (1, tl) per-lane
    #          constant (lane-dense layout); VPU broadcasts either way.
    o_ref[...] = x_ref[...] - off_ref[...]


# --------------------------------------------------------------------------- #
# Tile selection                                                              #
# --------------------------------------------------------------------------- #

def _sublane_multiple(itemsize):
    # Native sublane packing: (8,128) f32, (16,128) bf16, (32,128) int8/fp8.
    return {4: 8, 2: 16, 1: 32}.get(itemsize, 8)


def _tile_candidates(extent, step):
    """Divisors of `extent` that are multiples of `step`, descending.
    Falls back to the full extent (always a legal block shape)."""
    cands = [t for t in range(step, extent + 1, step) if extent % t == 0]
    if not cands:
        cands = [extent]
    return sorted(cands, reverse=True)


def _pick_tiles(R, L, itemsize, budget_bytes=2 * 1024 * 1024):
    """Joint pick of (tr, tl) with block bytes <= budget (~2 MiB).

    Live set is ~4x block (input + output, each double-buffered) plus the tiny
    offset block, i.e. ~8 MiB — safe against the 16 MiB v5e scoped default and
    the 64 MiB physical VMEM on v7x without touching vmem_limit_bytes.
    """
    sub = _sublane_multiple(itemsize)
    row_cands = _tile_candidates(R, sub)
    lane_cands = _tile_candidates(L, 128)

    # Largest lane tile whose single-row footprint fits the budget.
    tl = next((t for t in lane_cands if t * itemsize <= budget_bytes), lane_cands[-1])
    # Largest row tile keeping the whole block within the budget.
    tr = next((t for t in row_cands if t * tl * itemsize <= budget_bytes), row_cands[-1])

    # Ensure >= 2 grid steps when possible so v7x megacore has work to split.
    if R // tr == 1 and L // tl == 1:
        smaller_lane = [t for t in lane_cands if t < tl]
        smaller_row = [t for t in row_cands if t < tr]
        if smaller_lane:
            tl = smaller_lane[0]
        elif smaller_row:
            tr = smaller_row[0]
    return tr, tl


# --------------------------------------------------------------------------- #
# Wrapper                                                                     #
# --------------------------------------------------------------------------- #

def normalization_forward(x_nchw, mean, std, *, donate=False):
    """y = x - mean/std (per-channel constant).  x: (N,C,H,W), mean/std: (C,)."""
    N, C, H, W = x_nchw.shape
    dtype = x_nchw.dtype
    itemsize = jnp.dtype(dtype).itemsize

    # Fold the per-channel constant on the host in float32, cast once.
    off_c = (mean.astype(jnp.float32) / std.astype(jnp.float32)).astype(dtype)  # (C,)

    lane_dense_spatial = (H * W) % 128 == 0
    if lane_dense_spatial:
        # rows = N*C on sublanes, spatial = H*W on lanes (multiple of 128 ->
        # unmasked lane-dense stores).  Offset is a (rows, 1) column, constant
        # across the innermost (lane) grid axis so its DMA is skipped on revisits.
        R, L = N * C, H * W
        x2d = x_nchw.reshape(R, L)
        off2d = jnp.tile(off_c, N).reshape(R, 1)

        def off_block(tr, tl):
            return (tr, 1)

        off_map = lambda i, j: (i, 0)
    else:
        # Small/awkward spatial dims (e.g. 8x8 deep ResNet stages): flatten
        # channels into the lane axis so the last dim is large and (usually)
        # a multiple of 128 -> lane-dense stores.  Offset becomes a (1, C*H*W)
        # row vector (each channel's value repeated H*W times).
        R, L = N, C * H * W
        x2d = x_nchw.reshape(R, L)
        off2d = jnp.repeat(off_c, H * W).reshape(1, L)

        def off_block(tr, tl):
            return (1, tl)

        off_map = lambda i, j: (0, j)

    tr, tl = _pick_tiles(R, L, itemsize)

    cost = pl.CostEstimate(
        flops=int(R * L),
        transcendentals=0,
        bytes_accessed=int(2 * R * L * itemsize + off2d.size * itemsize),
    )

    extra = {}
    if donate:
        # Safe: each output tile is written only after its (identically indexed)
        # input tile is read; avoids a second full-size HBM buffer when x is dead.
        extra["input_output_aliases"] = {0: 0}

    out2d = pl.pallas_call(
        _norm_kernel,
        out_shape=jax.ShapeDtypeStruct((R, L), dtype),
        grid=(R // tr, L // tl),  # lane axis j innermost
        in_specs=[pl.BlockSpec((tr, tl), lambda i, j: (i, j)),
                  pl.BlockSpec(off_block(tr, tl), off_map)],
        out_specs=pl.BlockSpec((tr, tl), lambda i, j: (i, j)),
        compiler_params=pltpu.CompilerParams(
            dimension_semantics=("parallel", "parallel")),
        cost_estimate=cost,
        **extra,
    )(x2d, off2d)

    return out2d.reshape(N, C, H, W)


# --------------------------------------------------------------------------- #
# Pure-JAX reference (mirrors the PyTorch forward exactly)                    #
# --------------------------------------------------------------------------- #

def reference_forward(x_nchw, mean, std):
    # y = x - self.mean / self.std   (same precedence as the PyTorch module)
    return x_nchw - (mean / std).reshape(1, -1, 1, 1)


if __name__ == "__main__":
    key = jax.random.PRNGKey(0)
    k_x, k_m, k_s, k_x2 = jax.random.split(key, 4)

    n_channels = 4
    x = jax.random.normal(k_x, (2, n_channels, 16, 16), jnp.float32)

    ok = True

    # Case 1: module defaults (mean=None -> zeros, std=None -> 0.1)
    mean_d = jnp.zeros((n_channels,), jnp.float32)
    std_d = jnp.full((n_channels,), 0.1, jnp.float32)
    out = jax.block_until_ready(normalization_forward(x, mean_d, std_d))
    ref = jax.block_until_ready(reference_forward(x, mean_d, std_d))
    assert out.shape == ref.shape, (out.shape, ref.shape)
    ok &= bool(jnp.allclose(out, ref, atol=1e-6, rtol=1e-6))

    # Case 2: non-trivial per-channel mean/std
    mean = 0.5 * jax.random.normal(k_m, (n_channels,), jnp.float32)
    std = 0.5 + jax.random.uniform(k_s, (n_channels,), jnp.float32)
    out = jax.block_until_ready(normalization_forward(x, mean, std))
    ref = jax.block_until_ready(reference_forward(x, mean, std))
    assert out.shape == ref.shape, (out.shape, ref.shape)
    ok &= bool(jnp.allclose(out, ref, atol=1e-6, rtol=1e-6))

    # Case 3: small spatial dims (H*W = 64 < 128) -> lane-dense (N, C*H*W) path
    x_small = jax.random.normal(k_x2, (2, n_channels, 8, 8), jnp.float32)
    out = jax.block_until_ready(normalization_forward(x_small, mean, std))
    ref = jax.block_until_ready(reference_forward(x_small, mean, std))
    assert out.shape == ref.shape, (out.shape, ref.shape)
    ok &= bool(jnp.allclose(out, ref, atol=1e-6, rtol=1e-6))

    print("KERNEL_OK" if ok else "KERNEL_MISMATCH")
</pallas_src>

<mosaic_0001>
module attributes {stable_mosaic.version = 11 : i64} {
  func.func @_norm_kernel(%arg0: i32, %arg1: i32, %arg2: memref<8x128xf32, #tpu.memory_space<vmem>>, %arg3: memref<8x1xf32, #tpu.memory_space<vmem>>, %arg4: memref<8x128xf32, #tpu.memory_space<vmem>>) attributes {dimension_semantics = [#tpu.dimension_semantics<parallel>, #tpu.dimension_semantics<parallel>], iteration_bounds = array<i64: 1, 2>, scalar_prefetch = 0 : i64, scratch_operands = 0 : i64, tpu.core_type = #tpu.core_type<tc>, window_params = [{transform_indices = @transform_0, window_bounds = array<i64: 8, 128>}, {transform_indices = @transform_1, window_bounds = array<i64: 8, 1>}, {transform_indices = @transform_2, window_bounds = array<i64: 8, 128>}]} {
    %c0 = arith.constant 0 : index
    %c0_0 = arith.constant 0 : index
    %0 = vector.load %arg2[%c0, %c0_0] : memref<8x128xf32, #tpu.memory_space<vmem>>, vector<8x128xf32>
    %c0_1 = arith.constant 0 : index
    %c0_2 = arith.constant 0 : index
    %1 = vector.load %arg3[%c0_1, %c0_2] : memref<8x1xf32, #tpu.memory_space<vmem>>, vector<8x1xf32>
    %2 = vector.broadcast %1 : vector<8x1xf32> to vector<8x128xf32>
    %3 = arith.subf %0, %2 : vector<8x128xf32>
    %c0_3 = arith.constant 0 : index
    %c0_4 = arith.constant 0 : index
    %4 = vector.load %arg4[%c0_3, %c0_4] : memref<8x128xf32, #tpu.memory_space<vmem>>, vector<8x128xf32>
    tpu.vector_store %arg4[%c0_3, %c0_4], %3 {strides = array<i32>} : memref<8x128xf32, #tpu.memory_space<vmem>>, vector<8x128xf32>,
    return
  }
  func.func @transform_0(%arg0: i32, %arg1: i32) -> (i32, i32) {
    %c0_i32 = arith.constant 0 : i32
    return %arg0, %arg1 : i32, i32
  }
  func.func @transform_1(%arg0: i32, %arg1: i32) -> (i32, i32) {
    %c0_i32 = arith.constant 0 : i32
    %c0_i32_0 = arith.constant 0 : i32
    return %arg0, %c0_i32 : i32, i32
  }
  func.func @transform_2(%arg0: i32, %arg1: i32) -> (i32, i32) {
    %c0_i32 = arith.constant 0 : i32
    return %arg0, %arg1 : i32, i32
  }
}

</mosaic_0001>

<llo_original>
// kernel: tpu_custom_call.1
$region0: #{tpu_custom_call.1}
  #allocation0 [shape = 'u32[]', space=smem, size = 0x4, offset = 0x4, fixed_abs, tag = 'smem constant byte address 0x4 - core index']
  #allocation1 [shape = 'u32[72,128]{1,0:T(1,128)}', space=vmem, size = 0x9000, scoped, tag = 'internal scratch']
  %s0 = inlined_call_operand.hbm [shape: f32[8,256], index: 0, kind: input, shape index: {}]
  %s1 = inlined_call_operand.vmem [shape: f32[8,1], index: 1, kind: input, shape index: {}]
  %s2 = inlined_call_operand.hbm [shape: f32[8,256], index: 2, kind: output, shape index: {}]
  %s3 = sld [smem:[#allocation0]]
  $region45: #{tpu_custom_call.1} parent=0
    _
  %s5 = ssub.s32 1, %s3
  %s6 = scalar_select 0, %s5, %s3
  $region1: #{tpu_custom_call.1} parent=0
    #allocation2 [shape = 'u8[8192]{0}', space=vmem, size = 0x2000, scoped, tag = 'input window, operand 0']
    #allocation3 [shape = 's32[2]{0}', space=sflag, size = 0x8, scoped, tag = 'scoped memory for tpu_custom_call.1']
    #allocation4 [shape = 's32[2]{0}', space=sflag, size = 0x8, scoped, tag = 'scoped memory for tpu_custom_call.1']
    #allocation5 [shape = 'u8[8192]{0}', space=vmem, size = 0x2000, scoped, tag = 'output window, operand 0']
    %7 = vsyncpa [#allocation3], 0
    %s8 = scalar_lea.sflag [#allocation3], 1
    %9 = vsyncpa %s8, 0
    %10 = vsyncpa [#allocation4], 0
    %s11 = scalar_lea.sflag [#allocation4], 1
    %12 = vsyncpa %s11, 0
    loop: start=0, step=1, limit=4
    $region2: #{tpu_custom_call.1} parent=1 // loop_pre_header
      _
    $region3: #{tpu_custom_call.1} parent=1 // loop_header
      %s14 = sphi 0, %s18
      %p15 = scmp.ge.s32.totalorder %s14, 4
      %s21 = sphi 0, %s33
      %s22 = sphi 0, %s29
      %s23 = sphi 0, %s21
      %s24 = sphi 0, %s22
      %s25 = sphi 0, %s23
      %s26 = sphi 0, %s24
      %s38 = sphi 0, %s40
      %s41 = sphi 0, %s38
      %s42 = sphi 0, %s41
      %s58 = sphi 0, %s42
      %s64 = sphi 0, %s66
      %s67 = sphi 0, %s64
      %s68 = sphi 0, %s67
      %s84 = sphi 0, %s68
      %s92 = sphi 0, %s94
      %s95 = sphi 0, %s92
      %s96 = sphi 0, %s95
      %s112 = sphi 0, %s96
    $region4: #{tpu_custom_call.1} parent=1 // loop_header_branch
      %17 = sbr.rel (%p15) target = $region8
    $region5: #{tpu_custom_call.1} parent=1 // loop_body
      %s19 = ssub.s32 %s14, 1
      %s20 = ssub.s32 %s14, 2
      %s27 = sadd.s32 1, %s22
      %p28 = scmp.ge.s32.totalorder %s27, 2
      %s29 = scalar_select %p28, 0, %s27
      %s30 = sadd.s32 1, %s21
      %s31 = scalar_select %p28, %s30, %s21
      %p32 = scmp.ge.s32.totalorder %s31, 1
      %s33 = scalar_select %p32, 0, %s31
      %s34 = ssub.s32 %s21, %s33
      %s35 = ssub.s32 %s22, %s29
      %s36 = sor.u32 %s34, %s35
      %p37 = scmp.eq.s32.totalorder %s36, 0
      %s39 = sadd.s32 %s38, 1
      %s40 = scalar_select %p37, %s38, %s39
      %p43 = pneg %p37
      %p44 = scmp.eq.s32.totalorder %s14, 1
      %p45 = por %p43, %p44
      %p46 = scmp.ne.s32.totalorder %s38, %s41
      %p47 = scmp.eq.s32.totalorder %s14, 0
      %p48 = por %p46, %p47
      %p49 = scmp.ne.s32.totalorder %s38, %s41
      %p50 = scmp.eq.s32.totalorder %s19, 1
      %p51 = por %p49, %p50
      %p52 = scmp.ne.s32.totalorder %s41, %s42
      %p53 = scmp.eq.s32.totalorder %s19, 0
      %p54 = por %p52, %p53
      %p55 = scmp.ne.s32.totalorder %s41, %s42
      %p56 = scmp.eq.s32.totalorder %s20, 1
      %p57 = por %p55, %p56
      %p59 = scmp.ne.s32.totalorder %s42, %s58
      %p60 = scmp.eq.s32.totalorder %s20, 0
      %p61 = por %p59, %p60
      %s62 = ssub.s32 %s21, %s33
      %p63 = scmp.eq.s32.totalorder %s62, 0
      %s65 = sadd.s32 %s64, 1
      %s66 = scalar_select %p63, %s64, %s65
      %p69 = pneg %p63
      %p70 = scmp.eq.s32.totalorder %s14, 1
      %p71 = por %p69, %p70
      %p72 = scmp.ne.s32.totalorder %s64, %s67
      %p73 = scmp.eq.s32.totalorder %s14, 0
      %p74 = por %p72, %p73
      %p75 = scmp.ne.s32.totalorder %s64, %s67
      %p76 = scmp.eq.s32.totalorder %s19, 1
      %p77 = por %p75, %p76
      %p78 = scmp.ne.s32.totalorder %s67, %s68
      %p79 = scmp.eq.s32.totalorder %s19, 0
      %p80 = por %p78, %p79
      %p81 = scmp.ne.s32.totalorder %s67, %s68
      %p82 = scmp.eq.s32.totalorder %s20, 1
      %p83 = por %p81, %p82
      %p85 = scmp.ne.s32.totalorder %s68, %s84
      %p86 = scmp.eq.s32.totalorder %s20, 0
      %p87 = por %p85, %p86
      %s88 = ssub.s32 %s21, %s33
      %s89 = ssub.s32 %s22, %s29
      %s90 = sor.u32 %s88, %s89
      %p91 = scmp.eq.s32.totalorder %s90, 0
      %s93 = sadd.s32 %s92, 1
      %s94 = scalar_select %p91, %s92, %s93
      %p97 = pneg %p91
      %p98 = scmp.eq.s32.totalorder %s14, 1
      %p99 = por %p97, %p98
      %p100 = scmp.ne.s32.totalorder %s92, %s95
      %p101 = scmp.eq.s32.totalorder %s14, 0
      %p102 = por %p100, %p101
      %p103 = scmp.ne.s32.totalorder %s92, %s95
      %p104 = scmp.eq.s32.totalorder %s19, 1
      %p105 = por %p103, %p104
      %p106 = scmp.ne.s32.totalorder %s95, %s96
      %p107 = scmp.eq.s32.totalorder %s19, 0
      %p108 = por %p106, %p107
      %p109 = scmp.ne.s32.totalorder %s95, %s96
      %p110 = scmp.eq.s32.totalorder %s20, 1
      %p111 = por %p109, %p110
      %p113 = scmp.ne.s32.totalorder %s96, %s112
      %p114 = scmp.eq.s32.totalorder %s20, 0
      %p115 = por %p113, %p114
      %p116 = scmp.le.s32.totalorder 1, %s14
      %p117 = scmp.lt.s32.totalorder %s14, 3
      %p118 = pnand %p116, %p117
      %p119 = pneg %p118
      // Predicated region
      $region9: #{tpu_custom_call.1} parent=5 // pred_check
        _
      $region10: #{tpu_custom_call.1} parent=5 // pred_check_branch
        %121 = sbr.rel (%p118) target = $region12
      $region11: #{tpu_custom_call.1} parent=5 // pred_region
        %s122 = ssub.s32 %s14, 1
        // Predicated region
        $region13: #{tpu_custom_call.1} parent=11 // pred_check
          %p123 = pneg %p80
        $region14: #{tpu_custom_call.1} parent=11 // pred_check_branch
          %125 = sbr.rel (%p123) target = $region16
        $region15: #{tpu_custom_call.1} parent=11 // pred_region
          %p126 = scmp.lt.s32.totalorder %s23, 0
          %s127 = scalar_select %p126, %s23, 0
          %s128 = smul.addr %s127, 8
          %s129 = scalar_lea.vmem %s1, %s128
        $region16: #{tpu_custom_call.1} parent=11 // pred_fallthru
          _
      $region12: #{tpu_custom_call.1} parent=5 // pred_fallthru
        _
      %p130 = scmp.lt.s32.totalorder %s14, 2
      // Predicated region
      $region17: #{tpu_custom_call.1} parent=5 // pred_check
        %p131 = pneg %p130
      $region18: #{tpu_custom_call.1} parent=5 // pred_check_branch
        %133 = sbr.rel (%p131) target = $region20
      $region19: #{tpu_custom_call.1} parent=5 // pred_region
        // Predicated region
        $region21: #{tpu_custom_call.1} parent=19 // pred_check
          %p134 = pneg %p48
        $region22: #{tpu_custom_call.1} parent=19 // pred_check_branch
          %136 = sbr.rel (%p134) target = $region24
        $region23: #{tpu_custom_call.1} parent=19 // pred_region
          %s137 = sand.u32 %s38, 1
          %s138 = scalar_lea.sflag [#allocation3], %s137
          %s139 = sand.u32 %s38, 1
          %s140 = smul.addr %s139, 8
          %s141 = scalar_lea.vmem [#allocation2], %s140
          %143 = vsyncadd %s138, 0
          %s144 = smul.addr %s21, 2
          %s145 = sadd.s32 %s22, %s144
          %s146 = smul.addr %s145, 8
          %s147 = scalar_lea.hbm %s0, %s146
          %s149 = sshll.u32 %s147, 4
          %s150 = int_to_ptr.hbm [resolvable:$true] %s149
          %s151 = sshll.u32 %s141, 4
          %s152 = int_to_ptr.vmem [resolvable:$true] %s151
          %154 = dma.hbm_to_vmem [thread:$0]  %s150, 128, %s152, %s138
        $region24: #{tpu_custom_call.1} parent=19 // pred_fallthru
          _
      $region20: #{tpu_custom_call.1} parent=5 // pred_fallthru
        _
      %p155 = scmp.le.s32.totalorder 1, %s14
      %p156 = scmp.lt.s32.totalorder %s14, 3
      %p157 = pnand %p155, %p156
      %p158 = pneg %p157
      // Predicated region
      $region25: #{tpu_custom_call.1} parent=5 // pred_check
        _
      $region26: #{tpu_custom_call.1} parent=5 // pred_check_branch
        %160 = sbr.rel (%p157) target = $region28
      $region27: #{tpu_custom_call.1} parent=5 // pred_region
        %s161 = ssub.s32 %s14, 1
        %s162 = sand.u32 %s41, 1
        %s163 = scalar_lea.sflag [#allocation3], %s162
        %s164 = sand.u32 %s41, 1
        %s165 = smul.addr %s164, 8
        %s166 = scalar_lea.vmem [#allocation2], %s165
        // Predicated region
        $region29: #{tpu_custom_call.1} parent=27 // pred_check
          %p167 = pneg %p54
        $region30: #{tpu_custom_call.1} parent=27 // pred_check_branch
          %169 = sbr.rel (%p167) target = $region32
        $region31: #{tpu_custom_call.1} parent=27 // pred_region
          %171 = dma.done %s163, 128
        $region32: #{tpu_custom_call.1} parent=27 // pred_fallthru
          _
        %s172 = sand.u32 %s41, 1
        %s173 = scalar_lea.sflag [#allocation3], %s172
        %s174 = sand.u32 %s41, 1
        %s175 = smul.addr %s174, 8
        %s176 = scalar_lea.vmem [#allocation2], %s175
        %p177 = pneg %p54
        %p178 = pneg %p51
        %p179 = scmp.lt.s32.totalorder %s23, 0
        %s180 = scalar_select %p179, %s23, 0
        %s181 = smul.addr %s180, 8
        %s182 = scalar_lea.vmem %s1, %s181
        %p183 = pneg %p80
        %p184 = pneg %p77
        %p185 = pneg %p108
        %p186 = pneg %p105
        %s187 = sand.u32 %s95, 1
        %s188 = scalar_lea.sflag [#allocation4], %s187
        %s189 = sand.u32 %s95, 1
        %s190 = smul.addr %s189, 8
        %s191 = scalar_lea.vmem [#allocation5], %s190
        %p192 = scmp.lt.s32.totalorder %s23, 0
        %s193 = scalar_select %p192, %s23, 0
        %s194 = smul.addr %s193, 8
        %s195 = scalar_lea.vmem %s1, %s194
        %v196 = vld [vmem:[%s166] sm:$0xff]
        %v197 = vld [vmem:[%s195] sm:$0xff]
        %199 = vset.pattern.permute.xlu0 0
        %200 = vperm.xlu0 %199, %v197
        %v201 = vpop.permute.xlu0 %200
        %v203 = vsub.f32 %v196, %v201
        %204 = vst [vmem:[%s191] sm:$0xff] %v203
        %s205 = sand.u32 %s95, 1
        %s206 = scalar_lea.sflag [#allocation4], %s205
        %s207 = sand.u32 %s95, 1
        %s208 = smul.addr %s207, 8
        %s209 = scalar_lea.vmem [#allocation5], %s208
        // Predicated region
        $region33: #{tpu_custom_call.1} parent=27 // pred_check
          %p210 = pneg %p105
        $region34: #{tpu_custom_call.1} parent=27 // pred_check_branch
          %212 = sbr.rel (%p210) target = $region36
        $region35: #{tpu_custom_call.1} parent=27 // pred_region
          %214 = vsyncadd %s206, 0
          %s215 = smul.addr %s23, 2
          %s216 = sadd.s32 %s24, %s215
          %s217 = smul.addr %s216, 8
          %s218 = scalar_lea.hbm %s2, %s217
          %s220 = sshll.u32 %s209, 4
          %s221 = int_to_ptr.vmem [resolvable:$true] %s220
          %s222 = sshll.u32 %s218, 4
          %s223 = int_to_ptr.hbm [resolvable:$true] %s222
          %225 = dma.vmem_to_hbm [thread:$0]  %s221, 128, %s223, %s206
        $region36: #{tpu_custom_call.1} parent=27 // pred_fallthru
          _
      $region28: #{tpu_custom_call.1} parent=5 // pred_fallthru
        _
      %p226 = scmp.le.s32.totalorder 2, %s14
      // Predicated region
      $region37: #{tpu_custom_call.1} parent=5 // pred_check
        %p227 = pneg %p226
      $region38: #{tpu_custom_call.1} parent=5 // pred_check_branch
        %229 = sbr.rel (%p227) target = $region40
      $region39: #{tpu_custom_call.1} parent=5 // pred_region
        %s230 = ssub.s32 %s14, 2
        // Predicated region
        $region41: #{tpu_custom_call.1} parent=39 // pred_check
          %p231 = pneg %p111
        $region42: #{tpu_custom_call.1} parent=39 // pred_check_branch
          %233 = sbr.rel (%p231) target = $region44
        $region43: #{tpu_custom_call.1} parent=39 // pred_region
          %s234 = sand.u32 %s96, 1
          %s235 = scalar_lea.sflag [#allocation4], %s234
          %s236 = sand.u32 %s96, 1
          %s237 = smul.addr %s236, 8
          %s238 = scalar_lea.vmem [#allocation5], %s237
          %240 = dma.done %s235, 128
        $region44: #{tpu_custom_call.1} parent=39 // pred_fallthru
          _
      $region40: #{tpu_custom_call.1} parent=5 // pred_fallthru
        _
    $region6: #{tpu_custom_call.1} parent=1 // loop_footer
      %s18 = sadd.s32 1, %s14
    $region7: #{tpu_custom_call.1} parent=1 // loop_footer_branch
      %13 = sbr.rel target = $region3
    $region8: #{tpu_custom_call.1} parent=1 // loop_exit
      _
    %241 = vsyncpa [#allocation3], 1
    %s242 = scalar_lea.sflag [#allocation3], 1
    %243 = vsyncpa %s242, 1
    %244 = vsyncpa [#allocation4], 1
    %s245 = scalar_lea.sflag [#allocation4], 1
    %246 = vsyncpa %s245, 1

</llo_original>
